<compile_context>
chip_gen: v7x
topology: tpu7x:2x2x1
jax: 0.10.0
libtpu: 0.0.40
codegen_flags: <defaults>
</compile_context>

<pallas_src>
import functools
import math

import jax
import jax.numpy as jnp
from jax import lax
from jax.experimental import pallas as pl
from jax.experimental.pallas import tpu as pltpu


_OUT_LANES = 128               # lane-dense packed output width (unmasked vst)
_IDX_LANE0 = _OUT_LANES // 2   # expert indices live in lanes [64, 64 + top_k)


def _round_up(x, m):
    return (x + m - 1) // m * m


def _moe_gate_kernel(x_ref, wt_ref, out_ref, *, top_k, norm_topk_prob,
                     out_lanes):
    """One token tile: logits -> top-k -> (re)normalized weights, packed i32."""
    # logits = x @ W^T on the MXU; operands stream in their given dtype
    # (bf16 by default), accumulation stays f32.
    logits = jnp.dot(x_ref[...], wt_ref[...],
                     preferred_element_type=jnp.float32)          # (tm, E) f32
    tm, n_exp = logits.shape
    half = out_lanes // 2

    col_ids = lax.broadcasted_iota(jnp.int32, (tm, n_exp), 1)
    lane_ids = lax.broadcasted_iota(jnp.int32, (tm, out_lanes), 1)

    # Softmax is strictly monotone per row, so top-k on the raw logits gives
    # the same indices / tie ordering as top-k on softmax(logits).  Only the
    # k selected logits are exponentiated below.
    work = logits
    vals = jnp.zeros((tm, out_lanes), jnp.float32)   # exp(v_k - row_max)
    idxs = jnp.zeros((tm, out_lanes), jnp.int32)
    row_max = None
    sel_sum = None
    for kk in range(top_k):
        v = jnp.max(work, axis=-1, keepdims=True)                 # (tm, 1)
        # lowest-index occurrence of the max (torch.topk duplicate behaviour)
        idx = jnp.min(jnp.where(work == v, col_ids, n_exp),
                      axis=-1, keepdims=True)                     # (tm, 1)
        if kk == 0:
            row_max = v                      # top-1 of logits == row max
            w = jnp.ones_like(v)             # exp(v - row_max) == 1
            sel_sum = w
        else:
            w = jnp.exp(v - row_max)
            sel_sum = sel_sum + w
        vals = jnp.where(lane_ids == kk, w, vals)
        idxs = jnp.where(lane_ids == half + kk, idx, idxs)
        if kk + 1 < top_k:
            work = jnp.where(col_ids == idx, -jnp.inf, work)
    # TODO(synk): a combined sortable-key (single-reduce) argmax would halve
    # the per-k XLU passes, but gives up exact f32 tie semantics; kept exact.

    if norm_topk_prob and top_k > 1:
        # Renormalized over the selected experts: the full-row softmax
        # denominator cancels, so it is never computed on this path.
        denom = sel_sum + 1e-20
    else:
        # Exact softmax probabilities: one (tm, E) exp (EUP) + one reduction.
        denom = jnp.sum(jnp.exp(logits - row_max), axis=-1, keepdims=True)
    weights = vals * pl.reciprocal(denom, approx=False)   # pad lanes stay 0

    # Pack weights (f32 bit pattern, lanes [0,64)) and expert indices
    # (lanes [64,128)) into one lane-dense int32 slab -> single unmasked vst.
    packed = jnp.where(lane_ids < half,
                       pltpu.bitcast(weights, jnp.int32), idxs)
    out_ref[...] = packed


def _vmem_bytes_needed(tile, h, n_exp, x_item, w_item, w_bufs):
    x_bufs = 2 * tile * h * x_item                    # double-buffered tokens
    w_bytes = w_bufs * h * n_exp * w_item             # gate weight
    out_bufs = 2 * tile * _OUT_LANES * 4              # double-buffered output
    temps = tile * (4 * n_exp + 3 * _OUT_LANES) * 4   # logits/work/iotas/slabs
    return x_bufs + w_bytes + out_bufs + temps


def _vmem_budget_bytes():
    phys = 64 << 20                                   # conservative (v7x/TC)
    try:
        info = pltpu.get_tpu_info()
        cap = getattr(info, "vmem_capacity_bytes", None)
        if cap:
            phys = int(cap)                           # 128 MiB on v5e/v6e
    except Exception:
        pass
    return max(32 << 20, phys - (12 << 20))           # compiler headroom


def prepare_gate_weight(weight, compute_dtype=jnp.bfloat16):
    """Transpose (E, H) -> (H, E) and cast ONCE (model-load time, not per call)."""
    wt = weight.T
    if compute_dtype is not None:
        wt = wt.astype(compute_dtype)
    return wt


def moe_gate(hidden_states, weight_t, *, top_k, norm_topk_prob,
             tile_tokens=1024, compute_dtype=jnp.bfloat16):
    """MoEGate forward (eval mode).

    hidden_states: (B, S, H).
    weight_t:      (H, E) pre-transposed gate weight (see prepare_gate_weight).
    Returns (topk_idx (N, k) int32, topk_weight (N, k) f32, aux_loss=None).
    """
    bsz, seq_len, h = hidden_states.shape
    assert weight_t.shape[0] == h, "weight_t must be (H, E); use prepare_gate_weight"
    n_experts = weight_t.shape[1]
    assert 0 < top_k <= _IDX_LANE0
    n_tokens = bsz * seq_len

    x = hidden_states.reshape(n_tokens, h)
    wt = weight_t
    if compute_dtype is not None:
        # bf16 streaming by default: halves HBM traffic; MXU accum stays f32.
        # (In a real model activations are usually already bf16 -> no-op cast.)
        if x.dtype != compute_dtype:
            x = x.astype(compute_dtype)
        if wt.dtype != compute_dtype:
            wt = wt.astype(compute_dtype)

    x_item = jnp.dtype(x.dtype).itemsize
    w_item = jnp.dtype(wt.dtype).itemsize

    # ---- token tiling: big tiles, no wrapper-side padding.  Pallas handles
    # the partial trailing block: this op is strictly row-wise, so garbage
    # rows of that block are harmless and their output writes are masked. ----
    budget = _vmem_budget_bytes()
    tile = min(_round_up(max(tile_tokens, 8), 8), _round_up(n_tokens, 8))
    while tile > 8 and _vmem_bytes_needed(tile, h, n_experts,
                                          x_item, w_item, 1) > budget:
        tile = max(8, _round_up(tile // 2, 8))
    grid = (pl.cdiv(n_tokens, tile),)

    kernel = functools.partial(_moe_gate_kernel, top_k=top_k,
                               norm_topk_prob=norm_topk_prob,
                               out_lanes=_OUT_LANES)

    def run(single_buffer_weight):
        w_bufs = 1 if single_buffer_weight else 2
        need = _vmem_bytes_needed(tile, h, n_experts, x_item, w_item, w_bufs)
        vmem_limit = int(min(budget,
                             max(16 << 20, int(need * 1.25) + (4 << 20))))
        w_spec_kwargs = {}
        if single_buffer_weight:
            # Constant block index -> the second pipeline buffer is pure
            # VMEM waste; single-buffer the gate weight.
            w_spec_kwargs["pipeline_mode"] = pl.Buffered(1)
        return pl.pallas_call(
            kernel,
            out_shape=jax.ShapeDtypeStruct((n_tokens, _OUT_LANES), jnp.int32),
            grid_spec=pltpu.PrefetchScalarGridSpec(
                num_scalar_prefetch=0,
                grid=grid,
                in_specs=[
                    pl.BlockSpec((tile, h), lambda i: (i, 0)),      # tokens
                    pl.BlockSpec((h, n_experts), lambda i: (0, 0),  # weight
                                 **w_spec_kwargs),
                ],
                out_specs=pl.BlockSpec((tile, _OUT_LANES), lambda i: (i, 0)),
            ),
            compiler_params=pltpu.CompilerParams(
                dimension_semantics=("parallel",),   # shards across TCs (v7x)
                vmem_limit_bytes=vmem_limit),
        )(x, wt)

    if hasattr(pl, "Buffered"):
        try:
            packed = run(single_buffer_weight=True)
        except Exception:
            packed = run(single_buffer_weight=False)   # conservative fallback
    else:
        packed = run(single_buffer_weight=False)

    # Unpack the lane-dense slab.  (Consumers that can read the packed layout
    # directly can skip this slice and avoid the readback entirely.)
    topk_weight = lax.bitcast_convert_type(packed[:, :top_k], jnp.float32)
    topk_idx = packed[:, _IDX_LANE0:_IDX_LANE0 + top_k]

    # TODO(synk): aux_loss is a training-only branch (self.training and
    # alpha > 0); the eval-mode forward returns None, reproduced here.
    aux_loss = None
    return topk_idx, topk_weight, aux_loss


def _reference(hidden_states, weight, *, top_k, norm_topk_prob,
               compute_dtype=None):
    """Plain-JAX reference replicating the PyTorch forward (eval mode)."""
    x = hidden_states.reshape(-1, hidden_states.shape[-1])
    w = weight
    if compute_dtype is not None:
        x = x.astype(compute_dtype)
        w = w.astype(compute_dtype)
    logits = jnp.dot(x, w.T, preferred_element_type=jnp.float32)
    scores = jax.nn.softmax(logits.astype(jnp.float32), axis=-1)
    tw, ti = jax.lax.top_k(scores, top_k)
    if top_k > 1 and norm_topk_prob:
        tw = tw / (jnp.sum(tw, axis=-1, keepdims=True) + 1e-20)
    return ti.astype(jnp.int32), tw


if __name__ == "__main__":
    # Small config consistent with the module:
    bsz, seq_len, hidden_size = 2, 8, 32
    n_routed_experts = 8
    num_experts_per_tok = 2

    key = jax.random.PRNGKey(0)
    k_x, k_w, k_x2 = jax.random.split(key, 3)

    # kaiming_uniform_(a=sqrt(5)) on (E, H): bound = 1/sqrt(fan_in) = 1/sqrt(H)
    bound = 1.0 / math.sqrt(hidden_size)
    weight = jax.random.uniform(k_w, (n_routed_experts, hidden_size),
                                dtype=jnp.float32, minval=-bound, maxval=bound)
    hidden_states = jax.random.normal(
        k_x, (bsz, seq_len, hidden_size), dtype=jnp.float32)
    hidden_ragged = jax.random.normal(
        k_x2, (3, 7, hidden_size), dtype=jnp.float32)   # 21 tokens: partial block

    cases = [
        (hidden_states, jnp.bfloat16, 1e-4),   # default bf16 streaming
        (hidden_states, jnp.float32, 1e-5),    # exact f32 path
        (hidden_ragged, jnp.bfloat16, 1e-4),   # ragged token count
    ]
    for hs, compute_dtype, tol in cases:
        wt = prepare_gate_weight(weight, compute_dtype)   # hoisted, once
        for norm_topk_prob in (True, False):
            topk_idx, topk_weight, aux_loss = moe_gate(
                hs, wt, top_k=num_experts_per_tok,
                norm_topk_prob=norm_topk_prob, compute_dtype=compute_dtype)
            jax.block_until_ready((topk_idx, topk_weight))

            ref_idx, ref_w = _reference(
                hs, weight, top_k=num_experts_per_tok,
                norm_topk_prob=norm_topk_prob, compute_dtype=compute_dtype)

            n_tok = hs.shape[0] * hs.shape[1]
            assert topk_idx.shape == (n_tok, num_experts_per_tok)
            assert topk_weight.shape == (n_tok, num_experts_per_tok)
            assert aux_loss is None
            assert bool(jnp.all(jnp.isfinite(topk_weight)))
            assert bool(jnp.all(topk_idx == ref_idx))
            assert bool(jnp.allclose(topk_weight, ref_w, atol=tol, rtol=tol))

    print("KERNEL_OK")
</pallas_src>

<mosaic_0001>
module attributes {stable_mosaic.version = 11 : i64} {
  func.func @_moe_gate_kernel(%arg0: i32, %arg1: memref<16x32xbf16, #tpu.memory_space<vmem>>, %arg2: memref<32x8xbf16, #tpu.memory_space<vmem>>, %arg3: memref<16x128xi32, #tpu.memory_space<vmem>>) attributes {dimension_semantics = [#tpu.dimension_semantics<parallel>], iteration_bounds = array<i64: 1>, scalar_prefetch = 0 : i64, scratch_operands = 0 : i64, tpu.core_type = #tpu.core_type<tc>, window_params = [{transform_indices = @transform_0, window_bounds = array<i64: 16, 32>}, {pipeline_mode = #tpu.pipeline_mode<synchronous>, transform_indices = @transform_1, window_bounds = array<i64: 32, 8>}, {transform_indices = @transform_2, window_bounds = array<i64: 16, 128>}]} {
    %c0 = arith.constant 0 : index
    %c0_0 = arith.constant 0 : index
    %0 = vector.load %arg1[%c0, %c0_0] : memref<16x32xbf16, #tpu.memory_space<vmem>>, vector<16x32xbf16>
    %c0_1 = arith.constant 0 : index
    %c0_2 = arith.constant 0 : index
    %1 = vector.load %arg2[%c0_1, %c0_2] : memref<32x8xbf16, #tpu.memory_space<vmem>>, vector<32x8xbf16>
    %cst = arith.constant dense<0.000000e+00> : vector<16x8xf32>
    %2 = tpu.matmul %0, %1, %cst {dimension_numbers = #tpu.dot_dimension_numbers<[1], [0], [0], [1], [0, 0, 1, 1], [], []>} : vector<16x32xbf16>, vector<32x8xbf16>, vector<16x8xf32> -> vector<16x8xf32>
    %3 = tpu.iota {dimensions = array<i32: 1>} : vector<16x8xi32>
    %4 = tpu.iota {dimensions = array<i32: 1>} : vector<16x128xi32>
    %cst_3 = arith.constant 0.000000e+00 : f32
    %5 = vector.broadcast %cst_3 : f32 to vector<16x128xf32>
    %c0_i32 = arith.constant 0 : i32
    %6 = vector.broadcast %c0_i32 : i32 to vector<16x128xi32>
    %cst_4 = arith.constant dense<0xFF800000> : vector<16xf32>
    %7 = vector.multi_reduction <maximumf>, %2, %cst_4 [1] : vector<16x8xf32> to vector<16xf32>
    %8 = vector.shape_cast %7 : vector<16xf32> to vector<16x1xf32>
    %9 = vector.broadcast %8 : vector<16x1xf32> to vector<16x8xf32>
    %10 = arith.cmpf oeq, %2, %9 : vector<16x8xf32>
    %c8_i32 = arith.constant 8 : i32
    %11 = vector.broadcast %c8_i32 : i32 to vector<16x8xi32>
    %12 = arith.select %10, %3, %11 : vector<16x8xi1>, vector<16x8xi32>
    %cst_5 = arith.constant dense<2147483647> : vector<16xi32>
    %13 = vector.multi_reduction <minsi>, %12, %cst_5 [1] : vector<16x8xi32> to vector<16xi32>
    %14 = vector.shape_cast %13 : vector<16xi32> to vector<16x1xi32>
    %cst_6 = arith.constant 1.000000e+00 : f32
    %15 = vector.broadcast %cst_6 : f32 to vector<16x1xf32>
    %c0_i32_7 = arith.constant 0 : i32
    %16 = vector.broadcast %c0_i32_7 : i32 to vector<16x128xi32>
    %17 = arith.cmpi eq, %4, %16 : vector<16x128xi32>
    %18 = vector.shape_cast %15 : vector<16x1xf32> to vector<16x1xf32>
    %19 = vector.broadcast %18 : vector<16x1xf32> to vector<16x128xf32>
    %20 = arith.select %17, %19, %5 : vector<16x128xi1>, vector<16x128xf32>
    %c64_i32 = arith.constant 64 : i32
    %21 = vector.broadcast %c64_i32 : i32 to vector<16x128xi32>
    %22 = arith.cmpi eq, %4, %21 : vector<16x128xi32>
    %23 = vector.shape_cast %14 : vector<16x1xi32> to vector<16x1xi32>
    %24 = vector.broadcast %23 : vector<16x1xi32> to vector<16x128xi32>
    %25 = arith.select %22, %24, %6 : vector<16x128xi1>, vector<16x128xi32>
    %26 = vector.broadcast %14 : vector<16x1xi32> to vector<16x8xi32>
    %27 = arith.cmpi eq, %3, %26 : vector<16x8xi32>
    %cst_8 = arith.constant 0xFF800000 : f32
    %28 = vector.broadcast %cst_8 : f32 to vector<16x8xf32>
    %29 = arith.select %27, %28, %2 : vector<16x8xi1>, vector<16x8xf32>
    %cst_9 = arith.constant dense<0xFF800000> : vector<16xf32>
    %30 = vector.multi_reduction <maximumf>, %29, %cst_9 [1] : vector<16x8xf32> to vector<16xf32>
    %31 = vector.shape_cast %30 : vector<16xf32> to vector<16x1xf32>
    %32 = vector.broadcast %31 : vector<16x1xf32> to vector<16x8xf32>
    %33 = arith.cmpf oeq, %29, %32 : vector<16x8xf32>
    %c8_i32_10 = arith.constant 8 : i32
    %34 = vector.broadcast %c8_i32_10 : i32 to vector<16x8xi32>
    %35 = arith.select %33, %3, %34 : vector<16x8xi1>, vector<16x8xi32>
    %cst_11 = arith.constant dense<2147483647> : vector<16xi32>
    %36 = vector.multi_reduction <minsi>, %35, %cst_11 [1] : vector<16x8xi32> to vector<16xi32>
    %37 = vector.shape_cast %36 : vector<16xi32> to vector<16x1xi32>
    %38 = arith.subf %31, %8 : vector<16x1xf32>
    %39 = math.exp %38 : vector<16x1xf32>
    %40 = arith.addf %15, %39 : vector<16x1xf32>
    %c1_i32 = arith.constant 1 : i32
    %41 = vector.broadcast %c1_i32 : i32 to vector<16x128xi32>
    %42 = arith.cmpi eq, %4, %41 : vector<16x128xi32>
    %43 = vector.shape_cast %39 : vector<16x1xf32> to vector<16x1xf32>
    %44 = vector.broadcast %43 : vector<16x1xf32> to vector<16x128xf32>
    %45 = arith.select %42, %44, %20 : vector<16x128xi1>, vector<16x128xf32>
    %c65_i32 = arith.constant 65 : i32
    %46 = vector.broadcast %c65_i32 : i32 to vector<16x128xi32>
    %47 = arith.cmpi eq, %4, %46 : vector<16x128xi32>
    %48 = vector.shape_cast %37 : vector<16x1xi32> to vector<16x1xi32>
    %49 = vector.broadcast %48 : vector<16x1xi32> to vector<16x128xi32>
    %50 = arith.select %47, %49, %25 : vector<16x128xi1>, vector<16x128xi32>
    %cst_12 = arith.constant 9.99999968E-21 : f32
    %51 = vector.broadcast %cst_12 : f32 to vector<16x1xf32>
    %52 = arith.addf %40, %51 : vector<16x1xf32>
    %53 = tpu.reciprocal %52 : vector<16x1xf32> -> vector<16x1xf32>
    %54 = vector.broadcast %53 : vector<16x1xf32> to vector<16x128xf32>
    %55 = arith.mulf %45, %54 : vector<16x128xf32>
    %c64_i32_13 = arith.constant 64 : i32
    %56 = vector.broadcast %c64_i32_13 : i32 to vector<16x128xi32>
    %57 = arith.cmpi slt, %4, %56 : vector<16x128xi32>
    %58 = tpu.bitcast %55 : vector<16x128xf32> -> vector<16x128xi32>
    %59 = arith.select %57, %58, %50 : vector<16x128xi1>, vector<16x128xi32>
    %c0_14 = arith.constant 0 : index
    %c0_15 = arith.constant 0 : index
    %60 = vector.load %arg3[%c0_14, %c0_15] : memref<16x128xi32, #tpu.memory_space<vmem>>, vector<16x128xi32>
    tpu.vector_store %arg3[%c0_14, %c0_15], %59 {strides = array<i32>} : memref<16x128xi32, #tpu.memory_space<vmem>>, vector<16x128xi32>,
    return
  }
  func.func @transform_0(%arg0: i32) -> (i32, i32) {
    %c0_i32 = arith.constant 0 : i32
    %c0_i32_0 = arith.constant 0 : i32
    return %arg0, %c0_i32 : i32, i32
  }
  func.func @transform_1(%arg0: i32) -> (i32, i32) {
    %c0_i32 = arith.constant 0 : i32
    %c0_i32_0 = arith.constant 0 : i32
    %c0_i32_1 = arith.constant 0 : i32
    return %c0_i32, %c0_i32_0 : i32, i32
  }
  func.func @transform_2(%arg0: i32) -> (i32, i32) {
    %c0_i32 = arith.constant 0 : i32
    %c0_i32_0 = arith.constant 0 : i32
    return %arg0, %c0_i32 : i32, i32
  }
}

module attributes {stable_mosaic.version = 11 : i64} {
  func.func @_moe_gate_kernel(%arg0: i32, %arg1: memref<16x32xbf16, #tpu.memory_space<vmem>>, %arg2: memref<32x8xbf16, #tpu.memory_space<vmem>>, %arg3: memref<16x128xi32, #tpu.memory_space<vmem>>) attributes {dimension_semantics = [#tpu.dimension_semantics<parallel>], iteration_bounds = array<i64: 1>, scalar_prefetch = 0 : i64, scratch_operands = 0 : i64, tpu.core_type = #tpu.core_type<tc>, window_params = [{transform_indices = @transform_0, window_bounds = array<i64: 16, 32>}, {pipeline_mode = #tpu.pipeline_mode<synchronous>, transform_indices = @transform_1, window_bounds = array<i64: 32, 8>}, {transform_indices = @transform_2, window_bounds = array<i64: 16, 128>}]} {
    %c0 = arith.constant 0 : index
    %c0_0 = arith.constant 0 : index
    %0 = vector.load %arg1[%c0, %c0_0] : memref<16x32xbf16, #tpu.memory_space<vmem>>, vector<16x32xbf16>
    %c0_1 = arith.constant 0 : index
    %c0_2 = arith.constant 0 : index
    %1 = vector.load %arg2[%c0_1, %c0_2] : memref<32x8xbf16, #tpu.memory_space<vmem>>, vector<32x8xbf16>
    %cst = arith.constant dense<0.000000e+00> : vector<16x8xf32>
    %2 = tpu.matmul %0, %1, %cst {dimension_numbers = #tpu.dot_dimension_numbers<[1], [0], [0], [1], [0, 0, 1, 1], [], []>} : vector<16x32xbf16>, vector<32x8xbf16>, vector<16x8xf32> -> vector<16x8xf32>
    %3 = tpu.iota {dimensions = array<i32: 1>} : vector<16x8xi32>
    %4 = tpu.iota {dimensions = array<i32: 1>} : vector<16x128xi32>
    %cst_3 = arith.constant 0.000000e+00 : f32
    %5 = vector.broadcast %cst_3 : f32 to vector<16x128xf32>
    %c0_i32 = arith.constant 0 : i32
    %6 = vector.broadcast %c0_i32 : i32 to vector<16x128xi32>
    %cst_4 = arith.constant dense<0xFF800000> : vector<16xf32>
    %7 = vector.multi_reduction <maximumf>, %2, %cst_4 [1] : vector<16x8xf32> to vector<16xf32>
    %8 = vector.shape_cast %7 : vector<16xf32> to vector<16x1xf32>
    %9 = vector.broadcast %8 : vector<16x1xf32> to vector<16x8xf32>
    %10 = arith.cmpf oeq, %2, %9 : vector<16x8xf32>
    %c8_i32 = arith.constant 8 : i32
    %11 = vector.broadcast %c8_i32 : i32 to vector<16x8xi32>
    %12 = arith.select %10, %3, %11 : vector<16x8xi1>, vector<16x8xi32>
    %cst_5 = arith.constant dense<2147483647> : vector<16xi32>
    %13 = vector.multi_reduction <minsi>, %12, %cst_5 [1] : vector<16x8xi32> to vector<16xi32>
    %14 = vector.shape_cast %13 : vector<16xi32> to vector<16x1xi32>
    %cst_6 = arith.constant 1.000000e+00 : f32
    %15 = vector.broadcast %cst_6 : f32 to vector<16x1xf32>
    %c0_i32_7 = arith.constant 0 : i32
    %16 = vector.broadcast %c0_i32_7 : i32 to vector<16x128xi32>
    %17 = arith.cmpi eq, %4, %16 : vector<16x128xi32>
    %18 = vector.shape_cast %15 : vector<16x1xf32> to vector<16x1xf32>
    %19 = vector.broadcast %18 : vector<16x1xf32> to vector<16x128xf32>
    %20 = arith.select %17, %19, %5 : vector<16x128xi1>, vector<16x128xf32>
    %c64_i32 = arith.constant 64 : i32
    %21 = vector.broadcast %c64_i32 : i32 to vector<16x128xi32>
    %22 = arith.cmpi eq, %4, %21 : vector<16x128xi32>
    %23 = vector.shape_cast %14 : vector<16x1xi32> to vector<16x1xi32>
    %24 = vector.broadcast %23 : vector<16x1xi32> to vector<16x128xi32>
    %25 = arith.select %22, %24, %6 : vector<16x128xi1>, vector<16x128xi32>
    %26 = vector.broadcast %14 : vector<16x1xi32> to vector<16x8xi32>
    %27 = arith.cmpi eq, %3, %26 : vector<16x8xi32>
    %cst_8 = arith.constant 0xFF800000 : f32
    %28 = vector.broadcast %cst_8 : f32 to vector<16x8xf32>
    %29 = arith.select %27, %28, %2 : vector<16x8xi1>, vector<16x8xf32>
    %cst_9 = arith.constant dense<0xFF800000> : vector<16xf32>
    %30 = vector.multi_reduction <maximumf>, %29, %cst_9 [1] : vector<16x8xf32> to vector<16xf32>
    %31 = vector.shape_cast %30 : vector<16xf32> to vector<16x1xf32>
    %32 = vector.broadcast %31 : vector<16x1xf32> to vector<16x8xf32>
    %33 = arith.cmpf oeq, %29, %32 : vector<16x8xf32>
    %c8_i32_10 = arith.constant 8 : i32
    %34 = vector.broadcast %c8_i32_10 : i32 to vector<16x8xi32>
    %35 = arith.select %33, %3, %34 : vector<16x8xi1>, vector<16x8xi32>
    %cst_11 = arith.constant dense<2147483647> : vector<16xi32>
    %36 = vector.multi_reduction <minsi>, %35, %cst_11 [1] : vector<16x8xi32> to vector<16xi32>
    %37 = vector.shape_cast %36 : vector<16xi32> to vector<16x1xi32>
    %38 = arith.subf %31, %8 : vector<16x1xf32>
    %39 = math.exp %38 : vector<16x1xf32>
    %40 = arith.addf %15, %39 : vector<16x1xf32>
    %c1_i32 = arith.constant 1 : i32
    %41 = vector.broadcast %c1_i32 : i32 to vector<16x128xi32>
    %42 = arith.cmpi eq, %4, %41 : vector<16x128xi32>
    %43 = vector.shape_cast %39 : vector<16x1xf32> to vector<16x1xf32>
    %44 = vector.broadcast %43 : vector<16x1xf32> to vector<16x128xf32>
    %45 = arith.select %42, %44, %20 : vector<16x128xi1>, vector<16x128xf32>
    %c65_i32 = arith.constant 65 : i32
    %46 = vector.broadcast %c65_i32 : i32 to vector<16x128xi32>
    %47 = arith.cmpi eq, %4, %46 : vector<16x128xi32>
    %48 = vector.shape_cast %37 : vector<16x1xi32> to vector<16x1xi32>
    %49 = vector.broadcast %48 : vector<16x1xi32> to vector<16x128xi32>
    %50 = arith.select %47, %49, %25 : vector<16x128xi1>, vector<16x128xi32>
    %cst_12 = arith.constant 9.99999968E-21 : f32
    %51 = vector.broadcast %cst_12 : f32 to vector<16x1xf32>
    %52 = arith.addf %40, %51 : vector<16x1xf32>
    %53 = tpu.reciprocal %52 : vector<16x1xf32> -> vector<16x1xf32>
    %54 = vector.broadcast %53 : vector<16x1xf32> to vector<16x128xf32>
    %55 = arith.mulf %45, %54 : vector<16x128xf32>
    %c64_i32_13 = arith.constant 64 : i32
    %56 = vector.broadcast %c64_i32_13 : i32 to vector<16x128xi32>
    %57 = arith.cmpi slt, %4, %56 : vector<16x128xi32>
    %58 = tpu.bitcast %55 : vector<16x128xf32> -> vector<16x128xi32>
    %59 = arith.select %57, %58, %50 : vector<16x128xi1>, vector<16x128xi32>
    %c0_14 = arith.constant 0 : index
    %c0_15 = arith.constant 0 : index
    %60 = vector.load %arg3[%c0_14, %c0_15] : memref<16x128xi32, #tpu.memory_space<vmem>>, vector<16x128xi32>
    tpu.vector_store %arg3[%c0_14, %c0_15], %59 {strides = array<i32>} : memref<16x128xi32, #tpu.memory_space<vmem>>, vector<16x128xi32>,
    return
  }
  func.func @transform_0(%arg0: i32) -> (i32, i32) {
    %c0_i32 = arith.constant 0 : i32
    %c0_i32_0 = arith.constant 0 : i32
    return %arg0, %c0_i32 : i32, i32
  }
  func.func @transform_1(%arg0: i32) -> (i32, i32) {
    %c0_i32 = arith.constant 0 : i32
    %c0_i32_0 = arith.constant 0 : i32
    %c0_i32_1 = arith.constant 0 : i32
    return %c0_i32, %c0_i32_0 : i32, i32
  }
  func.func @transform_2(%arg0: i32) -> (i32, i32) {
    %c0_i32 = arith.constant 0 : i32
    %c0_i32_0 = arith.constant 0 : i32
    return %arg0, %c0_i32 : i32, i32
  }
}

</mosaic_0001>

<llo_original>
// kernel: tpu_custom_call.1
$region0: #{tpu_custom_call.1}
  #allocation0 [shape = 'u32[]', space=smem, size = 0x4, offset = 0x4, fixed_abs, tag = 'smem constant byte address 0x4 - core index']
  #allocation1 [shape = 'u32[144,128]{1,0:T(1,128)}', space=vmem, size = 0x12000, scoped, tag = 'internal scratch']
  %s0 = inlined_call_operand.vmem [shape: bf16[16,32], index: 0, kind: input, shape index: {}]
  %s1 = inlined_call_operand.vmem [shape: bf16[32,8], index: 1, kind: input, shape index: {}]
  %s2 = inlined_call_operand.hbm [shape: s32[16,128], index: 2, kind: output, shape index: {}]
  %s3 = sld [smem:[#allocation0]]
  $region18: #{tpu_custom_call.1} parent=0
    _
  %s5 = ssub.s32 1, %s3
  %s6 = scalar_select 0, %s5, %s3
  $region1: #{tpu_custom_call.1} parent=0
    #allocation2 [shape = 'u8[8192]{0}', space=vmem, size = 0x2000, scoped, tag = 'output window, operand 0, single buffered']
    #allocation3 [shape = 's32[1]{0}', space=sflag, size = 0x4, scoped, tag = 'scoped memory for tpu_custom_call.1']
    %7 = vsyncpa [#allocation3], 0
    // Predicated region
    $region2: #{tpu_custom_call.1} parent=1 // pred_check
      _
    $region3: #{tpu_custom_call.1} parent=1 // pred_check_branch
      %9 = sbr.rel (0) target = $region5
    $region4: #{tpu_custom_call.1} parent=1 // pred_region
      _
    $region5: #{tpu_custom_call.1} parent=1 // pred_fallthru
      _
    // Predicated region
    $region6: #{tpu_custom_call.1} parent=1 // pred_check
      _
    $region7: #{tpu_custom_call.1} parent=1 // pred_check_branch
      %11 = sbr.rel (0) target = $region9
    $region8: #{tpu_custom_call.1} parent=1 // pred_region
      _
    $region9: #{tpu_custom_call.1} parent=1 // pred_fallthru
      _
    %v13 = vld [vmem:[%s0] sm:$0xf]
    %v14 = vld [vmem:[%s0 + $0x4] sm:$0xf]
    %v15 = vld [vmem:[%s1] sm:$0xf]
    %v16 = vld [vmem:[%s1 + $0x4] sm:$0xf]
    %v17 = vld [vmem:[%s1 + $0x8] sm:$0xf]
    %v18 = vld [vmem:[%s1 + $0xc] sm:$0xf]
    %v21 = vunpack.c.l.b16 %v13
    %v22 = vunpack.c.l.b16 %v14
    %v23 = vpack.c.b16 %v22, %v21
    %v28 = vunpack.c.l.b16 %v15
    %v29 = vunpack.c.l.b16 %v16
    %v30 = vunpack.c.l.b16 %v17
    %v31 = vunpack.c.l.b16 %v18
    %v32 = vpack.c.b16 %v29, %v28
    %v33 = vpack.c.b16 %v31, %v30
    %vm36 = vcmask 261120
    %v38 = vsel %vm36, %v23, 0
    %40 = vmatprep.subr.bf16.mxu0 0
    %41 = vmatpush1.bf16.msra.mxu0 %v32
    %42 = vmatprep.subr.bf16.mxu0 0
    %43 = vmatpush1.bf16.msra.mxu0 %v33
    %44 = vmatprep.subr.bf16.mxu0 0
    %45 = vmatpush1.bf16.msra.mxu0 0
    %46 = vmatprep.subr.bf16.mxu0 0
    %47 = vmatpush1.bf16.msra.mxu0 0
    %48 = vmatprep.subr.bf16.mxu0 0
    %49 = vmatpush1.bf16.msra.mxu0 0
    %50 = vmatprep.subr.bf16.mxu0 0
    %51 = vmatpush1.bf16.msra.mxu0 0
    %52 = vmatprep.subr.bf16.mxu0 0
    %53 = vmatpush1.bf16.msra.mxu0 0
    %54 = vmatprep.subr.bf16.mxu0 0
    %55 = vmatpush1.bf16.msra.mxu0 0
    %56 = vmatprep.subr.bf16.mxu0 0
    %57 = vmatpush1.bf16.msra.mxu0 0
    %58 = vmatprep.subr.bf16.mxu0 0
    %59 = vmatpush1.bf16.msra.mxu0 0
    %60 = vmatprep.subr.bf16.mxu0 0
    %61 = vmatpush1.bf16.msra.mxu0 0
    %62 = vmatprep.subr.bf16.mxu0 0
    %63 = vmatpush1.bf16.msra.mxu0 0
    %64 = vmatprep.subr.bf16.mxu0 0
    %65 = vmatpush1.bf16.msra.mxu0 0
    %66 = vmatprep.subr.bf16.mxu0 0
    %67 = vmatpush1.bf16.msra.mxu0 0
    %68 = vmatprep.subr.bf16.mxu0 0
    %69 = vmatpush1.bf16.msra.mxu0 0
    %70 = vmatprep.subr.bf16.mxu0 0
    %71 = vmatpush1.bf16.msra.mxu0 0
    %72 = vmatprep.mubr.bf16.mxu0 0
    %73 = vmatmul.mubr.bf16.gmra.mrb[0].mxu0 %v38
    %v74 = vpop.f32.mrb[0].mxu0
    %v75 = vadd.f32 0.0, %v74
    %v76 = vpop.f32.mrb[0].mxu0
    %v77 = vpop.f32.mrb[0].mxu0
    %v78 = vadd.f32 0.0, %v77
    %v79 = vpop.f32.mrb[0].mxu0
    %80 = vdwg.mxu0
    %v81 = vlaneseq
    %v82 = vand.u32 %v81, 127
    %vm83 = vcmask 64512
    %v84 = vsel %vm83, %v75, -inf
    %85 = vmax.xlane.f32.xlu0 %v84
    %v86 = vpop.xlane.xlu0 %85
    %v87 = vsel %vm83, %v78, -inf
    %88 = vmax.xlane.f32.xlu0 %v87
    %v89 = vpop.xlane.xlu0 %88
    %vm90 = vcmp.eq.f32.partialorder %v75, %v86
    %vm91 = vcmp.eq.f32.partialorder %v78, %v89
    %v92 = vsel %vm90, %v82, 8
    %v93 = vsel %vm91, %v82, 8
    %v94 = vsel %vm83, %v92, 2147483647
    %v95 = vand.u32 %v94, 65535
    %v96 = vshra.s32 %v94, 16
    %v97 = vcvt.s32.f32 %v95
    %v98 = vcvt.s32.f32 %v96
    %99 = vmin.xlane.f32.xlu0 %v98
    %v100 = vpop.xlane.xlu0 %99
    %vm101 = vcmp.eq.f32.partialorder %v98, %v100
    %v102 = vsel %vm101, %v97, inf
    %103 = vmin.xlane.f32.xlu0 %v102
    %v104 = vpop.xlane.xlu0 %103
    %v105 = vcvt.f32.s32 %v104
    %v106 = vcvt.f32.s32 %v100
    %v107 = vshll.u32 %v106, 16
    %v108 = vadd.s32 %v107, %v105
    %v109 = vsel %vm83, %v93, 2147483647
    %v110 = vand.u32 %v109, 65535
    %v111 = vshra.s32 %v109, 16
    %v112 = vcvt.s32.f32 %v110
    %v113 = vcvt.s32.f32 %v111
    %114 = vmin.xlane.f32.xlu0 %v113
    %v115 = vpop.xlane.xlu0 %114
    %vm116 = vcmp.eq.f32.partialorder %v113, %v115
    %v117 = vsel %vm116, %v112, inf
    %118 = vmin.xlane.f32.xlu0 %v117
    %v119 = vpop.xlane.xlu0 %118
    %v120 = vcvt.f32.s32 %v119
    %v121 = vcvt.f32.s32 %v115
    %v122 = vshll.u32 %v121, 16
    %v123 = vadd.s32 %v122, %v120
    %vm124 = vcmp.eq.s32.totalorder %v82, 0
    %v125 = vsel %vm124, 1.0, 0.0
    %vm126 = vcmp.eq.s32.totalorder %v82, 64
    %v127 = vsel %vm126, %v108, 0
    %v128 = vsel %vm126, %v123, 0
    %vm129 = vcmp.eq.s32.totalorder %v82, %v108
    %vm130 = vcmp.eq.s32.totalorder %v82, %v123
    %v131 = vsel %vm129, -inf, %v75
    %v132 = vsel %vm130, -inf, %v78
    %v133 = vsel %vm83, %v131, -inf
    %134 = vmax.xlane.f32.xlu0 %v133
    %v135 = vpop.xlane.xlu0 %134
    %v136 = vsel %vm83, %v132, -inf
    %137 = vmax.xlane.f32.xlu0 %v136
    %v138 = vpop.xlane.xlu0 %137
    %vm139 = vcmp.eq.f32.partialorder %v131, %v135
    %vm140 = vcmp.eq.f32.partialorder %v132, %v138
    %v141 = vsel %vm139, %v82, 8
    %v142 = vsel %vm140, %v82, 8
    %v143 = vsel %vm83, %v141, 2147483647
    %v144 = vand.u32 %v143, 65535
    %v145 = vshra.s32 %v143, 16
    %v146 = vcvt.s32.f32 %v144
    %v147 = vcvt.s32.f32 %v145
    %148 = vmin.xlane.f32.xlu0 %v147
    %v149 = vpop.xlane.xlu0 %148
    %vm150 = vcmp.eq.f32.partialorder %v147, %v149
    %v151 = vsel %vm150, %v146, inf
    %152 = vmin.xlane.f32.xlu0 %v151
    %v153 = vpop.xlane.xlu0 %152
    %v154 = vcvt.f32.s32 %v153
    %v155 = vcvt.f32.s32 %v149
    %v156 = vshll.u32 %v155, 16
    %v157 = vadd.s32 %v156, %v154
    %v158 = vsel %vm83, %v142, 2147483647
    %v159 = vand.u32 %v158, 65535
    %v160 = vshra.s32 %v158, 16
    %v161 = vcvt.s32.f32 %v159
    %v162 = vcvt.s32.f32 %v160
    %163 = vmin.xlane.f32.xlu0 %v162
    %v164 = vpop.xlane.xlu0 %163
    %vm165 = vcmp.eq.f32.partialorder %v162, %v164
    %v166 = vsel %vm165, %v161, inf
    %167 = vmin.xlane.f32.xlu0 %v166
    %v168 = vpop.xlane.xlu0 %167
    %v169 = vcvt.f32.s32 %v168
    %v170 = vcvt.f32.s32 %v164
    %v171 = vshll.u32 %v170, 16
    %v172 = vadd.s32 %v171, %v169
    %v173 = vsub.f32 %v135, %v86
    %v174 = vsub.f32 %v138, %v89
    %v175 = vmul.f32 %v173, 1.442695
    %v176 = vpow.pop %v175
    %v177 = vmul.f32 %v174, 1.442695
    %v178 = vpow.pop %v177
    %v179 = vadd.f32 %v176, 1.0
    %v180 = vadd.f32 %v178, 1.0
    %vm181 = vcmp.eq.s32.totalorder %v82, 1
    %v182 = vsel %vm181, %v176, %v125
    %v183 = vsel %vm181, %v178, %v125
    %vm184 = vcmp.eq.s32.totalorder %v82, 65
    %v185 = vsel %vm184, %v157, %v127
    %v186 = vsel %vm184, %v172, %v128
    %v187 = vadd.f32 %v179, 1e-20
    %v188 = vadd.f32 %v180, 1e-20
    %v189 = vrcp.pop %v187
    %v190 = vrcp.pop %v188
    %v191 = vmul.f32 %v182, %v189
    %v192 = vmul.f32 %v183, %v190
    %vm193 = vcmp.lt.s32.totalorder %v82, 64
    %v196 = vsel %vm193, %v191, %v185
    %v197 = vsel %vm193, %v192, %v186
    %198 = vst [vmem:[#allocation2] sm:$0xff] %v196
    %199 = vst [vmem:[#allocation2 + $0x8] sm:$0xff] %v197
    // Predicated region
    $region10: #{tpu_custom_call.1} parent=1 // pred_check
      _
    $region11: #{tpu_custom_call.1} parent=1 // pred_check_branch
      %201 = sbr.rel (0) target = $region13
    $region12: #{tpu_custom_call.1} parent=1 // pred_region
      %s203 = ssub.s32 256, 256
      %204 = vsyncadd [#allocation3], %s203
      %s205 = sshll.u32 [#allocation2], 4
      %s206 = int_to_ptr.vmem [resolvable:$true] %s205
      %211 = dma.vmem_to_hbm [thread:$0]  %s206, 256, %s2, [#allocation3], 128, 128, 8
    $region13: #{tpu_custom_call.1} parent=1 // pred_fallthru
      _
    // Predicated region
    $region14: #{tpu_custom_call.1} parent=1 // pred_check
      _
    $region15: #{tpu_custom_call.1} parent=1 // pred_check_branch
      %213 = sbr.rel (0) target = $region17
    $region16: #{tpu_custom_call.1} parent=1 // pred_region
      %214 = dma.done [#allocation3], 256
    $region17: #{tpu_custom_call.1} parent=1 // pred_fallthru
      _
    %215 = vsyncpa [#allocation3], 1

// kernel: tpu_custom_call.1
$region0: #{tpu_custom_call.1}
  #allocation0 [shape = 'u32[]', space=smem, size = 0x4, offset = 0x4, fixed_abs, tag = 'smem constant byte address 0x4 - core index']
  #allocation1 [shape = 'u32[144,128]{1,0:T(1,128)}', space=vmem, size = 0x12000, scoped, tag = 'internal scratch']
  %s0 = inlined_call_operand.vmem [shape: bf16[16,32], index: 0, kind: input, shape index: {}]
  %s1 = inlined_call_operand.vmem [shape: bf16[32,8], index: 1, kind: input, shape index: {}]
  %s2 = inlined_call_operand.hbm [shape: s32[16,128], index: 2, kind: output, shape index: {}]
  %s3 = sld [smem:[#allocation0]]
  $region18: #{tpu_custom_call.1} parent=0
    _
  %s5 = ssub.s32 1, %s3
  %s6 = scalar_select 0, %s5, %s3
  $region1: #{tpu_custom_call.1} parent=0
    #allocation2 [shape = 'u8[8192]{0}', space=vmem, size = 0x2000, scoped, tag = 'output window, operand 0, single buffered']
    #allocation3 [shape = 's32[1]{0}', space=sflag, size = 0x4, scoped, tag = 'scoped memory for tpu_custom_call.1']
    %7 = vsyncpa [#allocation3], 0
    // Predicated region
    $region2: #{tpu_custom_call.1} parent=1 // pred_check
      _
    $region3: #{tpu_custom_call.1} parent=1 // pred_check_branch
      %9 = sbr.rel (0) target = $region5
    $region4: #{tpu_custom_call.1} parent=1 // pred_region
      _
    $region5: #{tpu_custom_call.1} parent=1 // pred_fallthru
      _
    // Predicated region
    $region6: #{tpu_custom_call.1} parent=1 // pred_check
      _
    $region7: #{tpu_custom_call.1} parent=1 // pred_check_branch
      %11 = sbr.rel (0) target = $region9
    $region8: #{tpu_custom_call.1} parent=1 // pred_region
      _
    $region9: #{tpu_custom_call.1} parent=1 // pred_fallthru
      _
    %v13 = vld [vmem:[%s0] sm:$0xf]
    %v14 = vld [vmem:[%s0 + $0x4] sm:$0xf]
    %v15 = vld [vmem:[%s1] sm:$0xf]
    %v16 = vld [vmem:[%s1 + $0x4] sm:$0xf]
    %v17 = vld [vmem:[%s1 + $0x8] sm:$0xf]
    %v18 = vld [vmem:[%s1 + $0xc] sm:$0xf]
    %v21 = vunpack.c.l.b16 %v13
    %v22 = vunpack.c.l.b16 %v14
    %v23 = vpack.c.b16 %v22, %v21
    %v28 = vunpack.c.l.b16 %v15
    %v29 = vunpack.c.l.b16 %v16
    %v30 = vunpack.c.l.b16 %v17
    %v31 = vunpack.c.l.b16 %v18
    %v32 = vpack.c.b16 %v29, %v28
    %v33 = vpack.c.b16 %v31, %v30
    %vm36 = vcmask 261120
    %v38 = vsel %vm36, %v23, 0
    %40 = vmatprep.subr.bf16.mxu0 0
    %41 = vmatpush1.bf16.msra.mxu0 %v32
    %42 = vmatprep.subr.bf16.mxu0 0
    %43 = vmatpush1.bf16.msra.mxu0 %v33
    %44 = vmatprep.subr.bf16.mxu0 0
    %45 = vmatpush1.bf16.msra.mxu0 0
    %46 = vmatprep.subr.bf16.mxu0 0
    %47 = vmatpush1.bf16.msra.mxu0 0
    %48 = vmatprep.subr.bf16.mxu0 0
    %49 = vmatpush1.bf16.msra.mxu0 0
    %50 = vmatprep.subr.bf16.mxu0 0
    %51 = vmatpush1.bf16.msra.mxu0 0
    %52 = vmatprep.subr.bf16.mxu0 0
    %53 = vmatpush1.bf16.msra.mxu0 0
    %54 = vmatprep.subr.bf16.mxu0 0
    %55 = vmatpush1.bf16.msra.mxu0 0
    %56 = vmatprep.subr.bf16.mxu0 0
    %57 = vmatpush1.bf16.msra.mxu0 0
    %58 = vmatprep.subr.bf16.mxu0 0
    %59 = vmatpush1.bf16.msra.mxu0 0
    %60 = vmatprep.subr.bf16.mxu0 0
    %61 = vmatpush1.bf16.msra.mxu0 0
    %62 = vmatprep.subr.bf16.mxu0 0
    %63 = vmatpush1.bf16.msra.mxu0 0
    %64 = vmatprep.subr.bf16.mxu0 0
    %65 = vmatpush1.bf16.msra.mxu0 0
    %66 = vmatprep.subr.bf16.mxu0 0
    %67 = vmatpush1.bf16.msra.mxu0 0
    %68 = vmatprep.subr.bf16.mxu0 0
    %69 = vmatpush1.bf16.msra.mxu0 0
    %70 = vmatprep.subr.bf16.mxu0 0
    %71 = vmatpush1.bf16.msra.mxu0 0
    %72 = vmatprep.mubr.bf16.mxu0 0
    %73 = vmatmul.mubr.bf16.gmra.mrb[0].mxu0 %v38
    %v74 = vpop.f32.mrb[0].mxu0
    %v75 = vadd.f32 0.0, %v74
    %v76 = vpop.f32.mrb[0].mxu0
    %v77 = vpop.f32.mrb[0].mxu0
    %v78 = vadd.f32 0.0, %v77
    %v79 = vpop.f32.mrb[0].mxu0
    %80 = vdwg.mxu0
    %v81 = vlaneseq
    %v82 = vand.u32 %v81, 127
    %vm83 = vcmask 64512
    %v84 = vsel %vm83, %v75, -inf
    %85 = vmax.xlane.f32.xlu0 %v84
    %v86 = vpop.xlane.xlu0 %85
    %v87 = vsel %vm83, %v78, -inf
    %88 = vmax.xlane.f32.xlu0 %v87
    %v89 = vpop.xlane.xlu0 %88
    %vm90 = vcmp.eq.f32.partialorder %v75, %v86
    %vm91 = vcmp.eq.f32.partialorder %v78, %v89
    %v92 = vsel %vm90, %v82, 8
    %v93 = vsel %vm91, %v82, 8
    %v94 = vsel %vm83, %v92, 2147483647
    %v95 = vand.u32 %v94, 65535
    %v96 = vshra.s32 %v94, 16
    %v97 = vcvt.s32.f32 %v95
    %v98 = vcvt.s32.f32 %v96
    %99 = vmin.xlane.f32.xlu0 %v98
    %v100 = vpop.xlane.xlu0 %99
    %vm101 = vcmp.eq.f32.partialorder %v98, %v100
    %v102 = vsel %vm101, %v97, inf
    %103 = vmin.xlane.f32.xlu0 %v102
    %v104 = vpop.xlane.xlu0 %103
    %v105 = vcvt.f32.s32 %v104
    %v106 = vcvt.f32.s32 %v100
    %v107 = vshll.u32 %v106, 16
    %v108 = vadd.s32 %v107, %v105
    %v109 = vsel %vm83, %v93, 2147483647
    %v110 = vand.u32 %v109, 65535
    %v111 = vshra.s32 %v109, 16
    %v112 = vcvt.s32.f32 %v110
    %v113 = vcvt.s32.f32 %v111
    %114 = vmin.xlane.f32.xlu0 %v113
    %v115 = vpop.xlane.xlu0 %114
    %vm116 = vcmp.eq.f32.partialorder %v113, %v115
    %v117 = vsel %vm116, %v112, inf
    %118 = vmin.xlane.f32.xlu0 %v117
    %v119 = vpop.xlane.xlu0 %118
    %v120 = vcvt.f32.s32 %v119
    %v121 = vcvt.f32.s32 %v115
    %v122 = vshll.u32 %v121, 16
    %v123 = vadd.s32 %v122, %v120
    %vm124 = vcmp.eq.s32.totalorder %v82, 0
    %v125 = vsel %vm124, 1.0, 0.0
    %vm126 = vcmp.eq.s32.totalorder %v82, 64
    %v127 = vsel %vm126, %v108, 0
    %v128 = vsel %vm126, %v123, 0
    %vm129 = vcmp.eq.s32.totalorder %v82, %v108
    %vm130 = vcmp.eq.s32.totalorder %v82, %v123
    %v131 = vsel %vm129, -inf, %v75
    %v132 = vsel %vm130, -inf, %v78
    %v133 = vsel %vm83, %v131, -inf
    %134 = vmax.xlane.f32.xlu0 %v133
    %v135 = vpop.xlane.xlu0 %134
    %v136 = vsel %vm83, %v132, -inf
    %137 = vmax.xlane.f32.xlu0 %v136
    %v138 = vpop.xlane.xlu0 %137
    %vm139 = vcmp.eq.f32.partialorder %v131, %v135
    %vm140 = vcmp.eq.f32.partialorder %v132, %v138
    %v141 = vsel %vm139, %v82, 8
    %v142 = vsel %vm140, %v82, 8
    %v143 = vsel %vm83, %v141, 2147483647
    %v144 = vand.u32 %v143, 65535
    %v145 = vshra.s32 %v143, 16
    %v146 = vcvt.s32.f32 %v144
    %v147 = vcvt.s32.f32 %v145
    %148 = vmin.xlane.f32.xlu0 %v147
    %v149 = vpop.xlane.xlu0 %148
    %vm150 = vcmp.eq.f32.partialorder %v147, %v149
    %v151 = vsel %vm150, %v146, inf
    %152 = vmin.xlane.f32.xlu0 %v151
    %v153 = vpop.xlane.xlu0 %152
    %v154 = vcvt.f32.s32 %v153
    %v155 = vcvt.f32.s32 %v149
    %v156 = vshll.u32 %v155, 16
    %v157 = vadd.s32 %v156, %v154
    %v158 = vsel %vm83, %v142, 2147483647
    %v159 = vand.u32 %v158, 65535
    %v160 = vshra.s32 %v158, 16
    %v161 = vcvt.s32.f32 %v159
    %v162 = vcvt.s32.f32 %v160
    %163 = vmin.xlane.f32.xlu0 %v162
    %v164 = vpop.xlane.xlu0 %163
    %vm165 = vcmp.eq.f32.partialorder %v162, %v164
    %v166 = vsel %vm165, %v161, inf
    %167 = vmin.xlane.f32.xlu0 %v166
    %v168 = vpop.xlane.xlu0 %167
    %v169 = vcvt.f32.s32 %v168
    %v170 = vcvt.f32.s32 %v164
    %v171 = vshll.u32 %v170, 16
    %v172 = vadd.s32 %v171, %v169
    %v173 = vsub.f32 %v135, %v86
    %v174 = vsub.f32 %v138, %v89
    %v175 = vmul.f32 %v173, 1.442695
    %v176 = vpow.pop %v175
    %v177 = vmul.f32 %v174, 1.442695
    %v178 = vpow.pop %v177
    %v179 = vadd.f32 %v176, 1.0
    %v180 = vadd.f32 %v178, 1.0
    %vm181 = vcmp.eq.s32.totalorder %v82, 1
    %v182 = vsel %vm181, %v176, %v125
    %v183 = vsel %vm181, %v178, %v125
    %vm184 = vcmp.eq.s32.totalorder %v82, 65
    %v185 = vsel %vm184, %v157, %v127
    %v186 = vsel %vm184, %v172, %v128
    %v187 = vadd.f32 %v179, 1e-20
    %v188 = vadd.f32 %v180, 1e-20
    %v189 = vrcp.pop %v187
    %v190 = vrcp.pop %v188
    %v191 = vmul.f32 %v182, %v189
    %v192 = vmul.f32 %v183, %v190
    %vm193 = vcmp.lt.s32.totalorder %v82, 64
    %v196 = vsel %vm193, %v191, %v185
    %v197 = vsel %vm193, %v192, %v186
    %198 = vst [vmem:[#allocation2] sm:$0xff] %v196
    %199 = vst [vmem:[#allocation2 + $0x8] sm:$0xff] %v197
    // Predicated region
    $region10: #{tpu_custom_call.1} parent=1 // pred_check
      _
    $region11: #{tpu_custom_call.1} parent=1 // pred_check_branch
      %201 = sbr.rel (0) target = $region13
    $region12: #{tpu_custom_call.1} parent=1 // pred_region
      %s203 = ssub.s32 256, 256
      %204 = vsyncadd [#allocation3], %s203
      %s205 = sshll.u32 [#allocation2], 4
      %s206 = int_to_ptr.vmem [resolvable:$true] %s205
      %211 = dma.vmem_to_hbm [thread:$0]  %s206, 256, %s2, [#allocation3], 128, 128, 8
    $region13: #{tpu_custom_call.1} parent=1 // pred_fallthru
      _
    // Predicated region
    $region14: #{tpu_custom_call.1} parent=1 // pred_check
      _
    $region15: #{tpu_custom_call.1} parent=1 // pred_check_branch
      %213 = sbr.rel (0) target = $region17
    $region16: #{tpu_custom_call.1} parent=1 // pred_region
      %214 = dma.done [#allocation3], 256
    $region17: #{tpu_custom_call.1} parent=1 // pred_fallthru
      _
    %215 = vsyncpa [#allocation3], 1

</llo_original>
